<compile_context>
chip_gen: v7x
topology: tpu7x:2x2x1
jax: 0.10.0
libtpu: 0.0.40
codegen_flags: <defaults>
</compile_context>

<pallas_src>
import jax
import jax.numpy as jnp
from jax.experimental import pallas as pl
from jax.experimental.pallas import tpu as pltpu


def _round_up(x, m):
    return ((x + m - 1) // m) * m


def _linear_kernel_fullk(x_ref, w_ref, b_ref, o_ref):
    # Single-shot: (tm, K) @ (K, tn) on the MXU with f32 accumulation,
    # bias add on the VPU, cast only at the final store.
    o_ref[...] = (
        jnp.dot(x_ref[...], w_ref[...], preferred_element_type=jnp.float32)
        + b_ref[...]
    ).astype(o_ref.dtype)


def _linear_kernel_kacc(x_ref, w_ref, b_ref, o_ref, acc_ref):
    # K-tiled reduction: accumulate in f32 VMEM scratch; init at k==0,
    # add bias + cast + store at the last k step.
    k = pl.program_id(2)

    @pl.when(k == 0)
    def _():
        acc_ref[...] = jnp.zeros_like(acc_ref)

    acc_ref[...] += jnp.dot(
        x_ref[...], w_ref[...], preferred_element_type=jnp.float32
    )

    @pl.when(k == pl.num_programs(2) - 1)
    def _():
        o_ref[...] = (acc_ref[...] + b_ref[...]).astype(o_ref.dtype)


def linear_classifier(x, w_t, b, *, tm=None, tn=None, tk=512, full_k_limit=2048):
    """Linear probe forward: x @ w_t + b.

    x:   (B, out_dim)            batch-major, feature last
    w_t: (out_dim, num_classes)  weight stored pre-transposed (lane-dense output)
    b:   (num_classes,)
    """
    M, K = x.shape
    K2, N = w_t.shape
    assert K == K2, f"feature dim mismatch: {K} vs {K2}"
    assert b.shape == (N,), f"bias shape {b.shape} != ({N},)"
    out_dtype = x.dtype

    # Large, (8, 128)-aligned tiles, clamped to the (padded) problem size.
    if tm is None:
        tm = min(256, _round_up(M, 8))
    if tn is None:
        tn = min(512, _round_up(N, 128))

    # cdiv-style grid via zero padding (sliced off afterwards); zero-padded
    # rows/cols/features contribute nothing so results are exact.
    M_pad = _round_up(M, tm)
    N_pad = _round_up(N, tn)
    if M_pad != M:
        x = jnp.pad(x, ((0, M_pad - M), (0, 0)))
    if N_pad != N:
        w_t = jnp.pad(w_t, ((0, 0), (0, N_pad - N)))
        b = jnp.pad(b, (0, N_pad - N))
    b2d = b.reshape(1, N_pad)

    if K <= full_k_limit:
        # ---- single-shot path: full K in one block, no accumulator ----
        out = pl.pallas_call(
            _linear_kernel_fullk,
            out_shape=jax.ShapeDtypeStruct((M_pad, N_pad), out_dtype),
            grid_spec=pltpu.PrefetchScalarGridSpec(
                num_scalar_prefetch=0,
                grid=(M_pad // tm, N_pad // tn),
                in_specs=[
                    pl.BlockSpec((tm, K), lambda i, j: (i, 0)),   # x tile, full K
                    pl.BlockSpec((K, tn), lambda i, j: (0, j)),   # w_t tile, full K
                    pl.BlockSpec((1, tn), lambda i, j: (0, j)),   # bias tile
                ],
                out_specs=pl.BlockSpec((tm, tn), lambda i, j: (i, j)),
            ),
            compiler_params=pltpu.CompilerParams(
                dimension_semantics=("parallel", "parallel")
            ),
        )(x, w_t, b2d)
    else:
        # ---- K-tiled reduction path for large feature dims ----
        tk = min(tk, _round_up(K, 128))
        K_pad = _round_up(K, tk)
        if K_pad != K:
            x = jnp.pad(x, ((0, 0), (0, K_pad - K)))
            w_t = jnp.pad(w_t, ((0, K_pad - K), (0, 0)))
        out = pl.pallas_call(
            _linear_kernel_kacc,
            out_shape=jax.ShapeDtypeStruct((M_pad, N_pad), out_dtype),
            grid_spec=pltpu.PrefetchScalarGridSpec(
                num_scalar_prefetch=0,
                grid=(M_pad // tm, N_pad // tn, K_pad // tk),
                in_specs=[
                    pl.BlockSpec((tm, tk), lambda i, j, k: (i, k)),
                    pl.BlockSpec((tk, tn), lambda i, j, k: (k, j)),
                    pl.BlockSpec((1, tn), lambda i, j, k: (0, j)),
                ],
                out_specs=pl.BlockSpec((tm, tn), lambda i, j, k: (i, j)),
                scratch_shapes=[pltpu.VMEM((tm, tn), jnp.float32)],
            ),
            compiler_params=pltpu.CompilerParams(
                dimension_semantics=("parallel", "parallel", "arbitrary")
            ),
        )(x, w_t, b2d)

    return out[:M, :N]


if __name__ == "__main__":
    # Small, module-consistent shapes: out_dim=32 (frozen feature dim),
    # num_classes=1000 (module default; exercises the padding path), batch=8.
    B, OUT_DIM, NUM_CLASSES = 8, 32, 1000

    key = jax.random.PRNGKey(0)
    kx, kw = jax.random.split(key)

    cls_tokens = jax.random.normal(kx, (B, OUT_DIM), dtype=jnp.float32)

    # Deterministic parameter init mirroring the module's __init__:
    #   weight.data.normal_(0.0, 0.01) -> torch shape (num_classes, out_dim);
    #   stored here transposed as (out_dim, num_classes). bias zeroed.
    w_t = 0.01 * jax.random.normal(kw, (OUT_DIM, NUM_CLASSES), dtype=jnp.float32)
    b = jnp.zeros((NUM_CLASSES,), dtype=jnp.float32)

    out = jax.block_until_ready(linear_classifier(cls_tokens, w_t, b))

    # Correctness check against plain-JAX reference.
    ref = cls_tokens @ w_t + b[None, :]
    assert out.shape == (B, NUM_CLASSES)
    assert jnp.allclose(out, ref, atol=1e-5, rtol=1e-5)

    # Exercise the K-tiled reduction path as well (large feature dim).
    Kbig = 4096
    xb = jax.random.normal(kx, (B, Kbig), dtype=jnp.float32)
    wb = 0.01 * jax.random.normal(kw, (Kbig, NUM_CLASSES), dtype=jnp.float32)
    out_big = jax.block_until_ready(linear_classifier(xb, wb, b))
    ref_big = xb @ wb + b[None, :]
    assert jnp.allclose(out_big, ref_big, atol=1e-4, rtol=1e-4)

    print("KERNEL_OK")
</pallas_src>

<mosaic_0001>
module attributes {stable_mosaic.version = 11 : i64} {
  func.func @_linear_kernel_fullk(%arg0: i32, %arg1: i32, %arg2: memref<8x32xf32, #tpu.memory_space<vmem>>, %arg3: memref<32x512xf32, #tpu.memory_space<vmem>>, %arg4: memref<1x512xf32, #tpu.memory_space<vmem>>, %arg5: memref<8x512xf32, #tpu.memory_space<vmem>>) attributes {dimension_semantics = [#tpu.dimension_semantics<parallel>, #tpu.dimension_semantics<parallel>], iteration_bounds = array<i64: 1, 2>, scalar_prefetch = 0 : i64, scratch_operands = 0 : i64, tpu.core_type = #tpu.core_type<tc>, window_params = [{transform_indices = @transform_0, window_bounds = array<i64: 8, 32>}, {transform_indices = @transform_1, window_bounds = array<i64: 32, 512>}, {transform_indices = @transform_2, window_bounds = array<i64: 1, 512>}, {transform_indices = @transform_3, window_bounds = array<i64: 8, 512>}]} {
    %c0 = arith.constant 0 : index
    %c0_0 = arith.constant 0 : index
    %0 = vector.load %arg2[%c0, %c0_0] : memref<8x32xf32, #tpu.memory_space<vmem>>, vector<8x32xf32>
    %c0_1 = arith.constant 0 : index
    %c0_2 = arith.constant 0 : index
    %1 = vector.load %arg3[%c0_1, %c0_2] : memref<32x512xf32, #tpu.memory_space<vmem>>, vector<32x512xf32>
    %cst = arith.constant dense<0.000000e+00> : vector<8x512xf32>
    %2 = tpu.matmul %0, %1, %cst {dimension_numbers = #tpu.dot_dimension_numbers<[1], [0], [0], [1], [0, 0, 1, 1], [], []>} : vector<8x32xf32>, vector<32x512xf32>, vector<8x512xf32> -> vector<8x512xf32>
    %c0_3 = arith.constant 0 : index
    %c0_4 = arith.constant 0 : index
    %3 = vector.load %arg4[%c0_3, %c0_4] : memref<1x512xf32, #tpu.memory_space<vmem>>, vector<1x512xf32>
    %4 = vector.broadcast %3 : vector<1x512xf32> to vector<8x512xf32>
    %5 = arith.addf %2, %4 : vector<8x512xf32>
    %c0_5 = arith.constant 0 : index
    %c0_6 = arith.constant 0 : index
    %6 = vector.load %arg5[%c0_5, %c0_6] : memref<8x512xf32, #tpu.memory_space<vmem>>, vector<8x512xf32>
    tpu.vector_store %arg5[%c0_5, %c0_6], %5 {strides = array<i32>} : memref<8x512xf32, #tpu.memory_space<vmem>>, vector<8x512xf32>,
    return
  }
  func.func @transform_0(%arg0: i32, %arg1: i32) -> (i32, i32) {
    %c0_i32 = arith.constant 0 : i32
    %c0_i32_0 = arith.constant 0 : i32
    return %arg0, %c0_i32 : i32, i32
  }
  func.func @transform_1(%arg0: i32, %arg1: i32) -> (i32, i32) {
    %c0_i32 = arith.constant 0 : i32
    %c0_i32_0 = arith.constant 0 : i32
    return %c0_i32, %arg1 : i32, i32
  }
  func.func @transform_2(%arg0: i32, %arg1: i32) -> (i32, i32) {
    %c0_i32 = arith.constant 0 : i32
    %c0_i32_0 = arith.constant 0 : i32
    return %c0_i32, %arg1 : i32, i32
  }
  func.func @transform_3(%arg0: i32, %arg1: i32) -> (i32, i32) {
    %c0_i32 = arith.constant 0 : i32
    return %arg0, %arg1 : i32, i32
  }
}

</mosaic_0001>

<llo_original>
// kernel: tpu_custom_call.1
$region0: #{tpu_custom_call.1}
  #allocation0 [shape = 'u32[]', space=smem, size = 0x4, offset = 0x4, fixed_abs, tag = 'smem constant byte address 0x4 - core index']
  #allocation1 [shape = 'u32[144,128]{1,0:T(1,128)}', space=vmem, size = 0x12000, scoped, tag = 'internal scratch']
  %s0 = inlined_call_operand.hbm [shape: f32[8,32], index: 0, kind: input, shape index: {}]
  %s1 = inlined_call_operand.hbm [shape: f32[32,1024], index: 1, kind: input, shape index: {}]
  %s2 = inlined_call_operand.hbm [shape: f32[1,1024], index: 2, kind: input, shape index: {}]
  %s3 = inlined_call_operand.hbm [shape: f32[8,1024], index: 3, kind: output, shape index: {}]
  %s4 = sld [smem:[#allocation0]]
  $region57: #{tpu_custom_call.1} parent=0
    _
  %s6 = ssub.s32 1, %s4
  %s7 = scalar_select 0, %s6, %s4
  $region1: #{tpu_custom_call.1} parent=0
    #allocation2 [shape = 'u8[4096]{0}', space=vmem, size = 0x1000, scoped, tag = 'input window, operand 0, single buffered']
    #allocation3 [shape = 's32[2]{0}', space=sflag, size = 0x8, scoped, tag = 'scoped memory for tpu_custom_call.1']
    #allocation4 [shape = 's32[2]{0}', space=sflag, size = 0x8, scoped, tag = 'scoped memory for tpu_custom_call.1']
    #allocation5 [shape = 'u8[131072]{0}', space=vmem, size = 0x20000, scoped, tag = 'input window, operand 1']
    #allocation6 [shape = 's32[2]{0}', space=sflag, size = 0x8, scoped, tag = 'scoped memory for tpu_custom_call.1']
    #allocation7 [shape = 'u8[4096]{0}', space=vmem, size = 0x1000, scoped, tag = 'input window, operand 2']
    #allocation8 [shape = 'u8[32768]{0}', space=vmem, size = 0x8000, scoped, tag = 'output window, operand 0']
    %8 = vsyncpa [#allocation3], 0
    %9 = vsyncpa [#allocation6], 0
    %s10 = scalar_lea.sflag [#allocation6], 1
    %11 = vsyncpa %s10, 0
    %12 = vsyncpa [#allocation4], 0
    %s13 = scalar_lea.sflag [#allocation4], 1
    %14 = vsyncpa %s13, 0
    loop: start=0, step=1, limit=4
    $region2: #{tpu_custom_call.1} parent=1 // loop_pre_header
      _
    $region3: #{tpu_custom_call.1} parent=1 // loop_header
      %s16 = sphi 0, %s20
      %p17 = scmp.ge.s32.totalorder %s16, 4
      %s23 = sphi 0, %s35
      %s24 = sphi 0, %s31
      %s25 = sphi 0, %s23
      %s26 = sphi 0, %s24
      %s27 = sphi 0, %s25
      %s28 = sphi 0, %s26
      %s38 = sphi 0, %s40
      %s41 = sphi 0, %s38
      %s42 = sphi 0, %s41
      %s58 = sphi 0, %s42
      %s64 = sphi 0, %s66
      %s67 = sphi 0, %s64
      %s68 = sphi 0, %s67
      %s84 = sphi 0, %s68
      %s90 = sphi 0, %s92
      %s93 = sphi 0, %s90
      %s94 = sphi 0, %s93
      %s110 = sphi 0, %s94
      %s118 = sphi 0, %s120
      %s121 = sphi 0, %s118
      %s122 = sphi 0, %s121
      %s138 = sphi 0, %s122
    $region4: #{tpu_custom_call.1} parent=1 // loop_header_branch
      %19 = sbr.rel (%p17) target = $region8
    $region5: #{tpu_custom_call.1} parent=1 // loop_body
      %s21 = ssub.s32 %s16, 1
      %s22 = ssub.s32 %s16, 2
      %s29 = sadd.s32 1, %s24
      %p30 = scmp.ge.s32.totalorder %s29, 2
      %s31 = scalar_select %p30, 0, %s29
      %s32 = sadd.s32 1, %s23
      %s33 = scalar_select %p30, %s32, %s23
      %p34 = scmp.ge.s32.totalorder %s33, 1
      %s35 = scalar_select %p34, 0, %s33
      %s36 = ssub.s32 %s23, %s35
      %p37 = scmp.eq.s32.totalorder %s36, 0
      %s39 = sadd.s32 %s38, 1
      %s40 = scalar_select %p37, %s38, %s39
      %p43 = pneg %p37
      %p44 = scmp.eq.s32.totalorder %s16, 1
      %p45 = por %p43, %p44
      %p46 = scmp.ne.s32.totalorder %s38, %s41
      %p47 = scmp.eq.s32.totalorder %s16, 0
      %p48 = por %p46, %p47
      %p49 = scmp.ne.s32.totalorder %s38, %s41
      %p50 = scmp.eq.s32.totalorder %s21, 1
      %p51 = por %p49, %p50
      %p52 = scmp.ne.s32.totalorder %s41, %s42
      %p53 = scmp.eq.s32.totalorder %s21, 0
      %p54 = por %p52, %p53
      %p55 = scmp.ne.s32.totalorder %s41, %s42
      %p56 = scmp.eq.s32.totalorder %s22, 1
      %p57 = por %p55, %p56
      %p59 = scmp.ne.s32.totalorder %s42, %s58
      %p60 = scmp.eq.s32.totalorder %s22, 0
      %p61 = por %p59, %p60
      %s62 = ssub.s32 %s24, %s31
      %p63 = scmp.eq.s32.totalorder %s62, 0
      %s65 = sadd.s32 %s64, 1
      %s66 = scalar_select %p63, %s64, %s65
      %p69 = pneg %p63
      %p70 = scmp.eq.s32.totalorder %s16, 1
      %p71 = por %p69, %p70
      %p72 = scmp.ne.s32.totalorder %s64, %s67
      %p73 = scmp.eq.s32.totalorder %s16, 0
      %p74 = por %p72, %p73
      %p75 = scmp.ne.s32.totalorder %s64, %s67
      %p76 = scmp.eq.s32.totalorder %s21, 1
      %p77 = por %p75, %p76
      %p78 = scmp.ne.s32.totalorder %s67, %s68
      %p79 = scmp.eq.s32.totalorder %s21, 0
      %p80 = por %p78, %p79
      %p81 = scmp.ne.s32.totalorder %s67, %s68
      %p82 = scmp.eq.s32.totalorder %s22, 1
      %p83 = por %p81, %p82
      %p85 = scmp.ne.s32.totalorder %s68, %s84
      %p86 = scmp.eq.s32.totalorder %s22, 0
      %p87 = por %p85, %p86
      %s88 = ssub.s32 %s24, %s31
      %p89 = scmp.eq.s32.totalorder %s88, 0
      %s91 = sadd.s32 %s90, 1
      %s92 = scalar_select %p89, %s90, %s91
      %p95 = pneg %p89
      %p96 = scmp.eq.s32.totalorder %s16, 1
      %p97 = por %p95, %p96
      %p98 = scmp.ne.s32.totalorder %s90, %s93
      %p99 = scmp.eq.s32.totalorder %s16, 0
      %p100 = por %p98, %p99
      %p101 = scmp.ne.s32.totalorder %s90, %s93
      %p102 = scmp.eq.s32.totalorder %s21, 1
      %p103 = por %p101, %p102
      %p104 = scmp.ne.s32.totalorder %s93, %s94
      %p105 = scmp.eq.s32.totalorder %s21, 0
      %p106 = por %p104, %p105
      %p107 = scmp.ne.s32.totalorder %s93, %s94
      %p108 = scmp.eq.s32.totalorder %s22, 1
      %p109 = por %p107, %p108
      %p111 = scmp.ne.s32.totalorder %s94, %s110
      %p112 = scmp.eq.s32.totalorder %s22, 0
      %p113 = por %p111, %p112
      %s114 = ssub.s32 %s23, %s35
      %s115 = ssub.s32 %s24, %s31
      %s116 = sor.u32 %s114, %s115
      %p117 = scmp.eq.s32.totalorder %s116, 0
      %s119 = sadd.s32 %s118, 1
      %s120 = scalar_select %p117, %s118, %s119
      %p123 = pneg %p117
      %p124 = scmp.eq.s32.totalorder %s16, 1
      %p125 = por %p123, %p124
      %p126 = scmp.ne.s32.totalorder %s118, %s121
      %p127 = scmp.eq.s32.totalorder %s16, 0
      %p128 = por %p126, %p127
      %p129 = scmp.ne.s32.totalorder %s118, %s121
      %p130 = scmp.eq.s32.totalorder %s21, 1
      %p131 = por %p129, %p130
      %p132 = scmp.ne.s32.totalorder %s121, %s122
      %p133 = scmp.eq.s32.totalorder %s21, 0
      %p134 = por %p132, %p133
      %p135 = scmp.ne.s32.totalorder %s121, %s122
      %p136 = scmp.eq.s32.totalorder %s22, 1
      %p137 = por %p135, %p136
      %p139 = scmp.ne.s32.totalorder %s122, %s138
      %p140 = scmp.eq.s32.totalorder %s22, 0
      %p141 = por %p139, %p140
      %p142 = scmp.le.s32.totalorder 1, %s16
      %p143 = scmp.lt.s32.totalorder %s16, 3
      %p144 = pnand %p142, %p143
      %p145 = pneg %p144
      // Predicated region
      $region9: #{tpu_custom_call.1} parent=5 // pred_check
        _
      $region10: #{tpu_custom_call.1} parent=5 // pred_check_branch
        %147 = sbr.rel (%p144) target = $region12
      $region11: #{tpu_custom_call.1} parent=5 // pred_region
        %s148 = ssub.s32 %s16, 1
        // Predicated region
        $region13: #{tpu_custom_call.1} parent=11 // pred_check
          %p149 = pneg %p54
        $region14: #{tpu_custom_call.1} parent=11 // pred_check_branch
          %151 = sbr.rel (%p149) target = $region16
        $region15: #{tpu_custom_call.1} parent=11 // pred_region
          %s153 = ssub.s32 128, 128
          %154 = vsyncadd [#allocation3], %s153
          %s155 = smul.addr %s25, 128
          %s156 = scalar_lea.hbm %s0, %s155
          %s158 = sshll.u32 [#allocation2], 4
          %s159 = int_to_ptr.vmem [resolvable:$true] %s158
          %161 = dma.hbm_to_vmem [thread:$0]  %s156, 128, %s159, [#allocation3]
        $region16: #{tpu_custom_call.1} parent=11 // pred_fallthru
          _
      $region12: #{tpu_custom_call.1} parent=5 // pred_fallthru
        _
      %p162 = scmp.lt.s32.totalorder %s16, 2
      // Predicated region
      $region17: #{tpu_custom_call.1} parent=5 // pred_check
        %p163 = pneg %p162
      $region18: #{tpu_custom_call.1} parent=5 // pred_check_branch
        %165 = sbr.rel (%p163) target = $region20
      $region19: #{tpu_custom_call.1} parent=5 // pred_region
        // Predicated region
        $region21: #{tpu_custom_call.1} parent=19 // pred_check
          %p166 = pneg %p74
        $region22: #{tpu_custom_call.1} parent=19 // pred_check_branch
          %168 = sbr.rel (%p166) target = $region24
        $region23: #{tpu_custom_call.1} parent=19 // pred_region
          %s169 = sand.u32 %s16, 1
          %s170 = scalar_lea.sflag [#allocation6], %s169
          %s171 = sand.u32 %s64, 1
          %s172 = smul.addr %s171, 128
          %s173 = scalar_lea.vmem [#allocation5], %s172
          %s174 = smul.u32 4, %s24
          %s176 = ssub.s32 2048, 2048
          %177 = vsyncadd %s170, %s176
          %s178 = smul.addr %s174, 128
          %s179 = scalar_lea.hbm %s1, %s178
          %s180 = sshll.u32 %s173, 4
          %s181 = int_to_ptr.vmem [resolvable:$true] %s180
          %186 = dma.hbm_to_vmem [thread:$0]  %s179, 2048, %s181, %s170, 1024, 512, 32
        $region24: #{tpu_custom_call.1} parent=19 // pred_fallthru
          _
        // Predicated region
        $region25: #{tpu_custom_call.1} parent=19 // pred_check
          %p187 = pneg %p100
        $region26: #{tpu_custom_call.1} parent=19 // pred_check_branch
          %189 = sbr.rel (%p187) target = $region28
        $region27: #{tpu_custom_call.1} parent=19 // pred_region
          %s190 = sand.u32 %s16, 1
          %s191 = scalar_lea.sflag [#allocation6], %s190
          %s192 = sand.u32 %s90, 1
          %s193 = smul.addr %s192, 4
          %s194 = scalar_lea.vmem [#allocation7], %s193
          %s195 = smul.u32 4, %s24
          %s197 = ssub.s32 64, 64
          %198 = vsyncadd %s191, %s197
          %s199 = smul.addr %s195, 16
          %s200 = scalar_lea.hbm %s2, %s199
          %s202 = sshll.u32 %s194, 4
          %s203 = int_to_ptr.vmem [resolvable:$true] %s202
          %205 = dma.hbm_to_vmem [thread:$0]  %s200, 64, %s203, %s191
        $region28: #{tpu_custom_call.1} parent=19 // pred_fallthru
          _
      $region20: #{tpu_custom_call.1} parent=5 // pred_fallthru
        _
      %p206 = scmp.le.s32.totalorder 1, %s16
      %p207 = scmp.lt.s32.totalorder %s16, 3
      %p208 = pnand %p206, %p207
      %p209 = pneg %p208
      // Predicated region
      $region29: #{tpu_custom_call.1} parent=5 // pred_check
        _
      $region30: #{tpu_custom_call.1} parent=5 // pred_check_branch
        %211 = sbr.rel (%p208) target = $region32
      $region31: #{tpu_custom_call.1} parent=5 // pred_region
        %s212 = ssub.s32 %s16, 1
        // Predicated region
        $region33: #{tpu_custom_call.1} parent=31 // pred_check
          %p213 = pneg %p54
        $region34: #{tpu_custom_call.1} parent=31 // pred_check_branch
          %215 = sbr.rel (%p213) target = $region36
        $region35: #{tpu_custom_call.1} parent=31 // pred_region
          %216 = dma.done [#allocation3], 128
        $region36: #{tpu_custom_call.1} parent=31 // pred_fallthru
          _
        %s217 = sand.u32 %s21, 1
        %s218 = scalar_lea.sflag [#allocation6], %s217
        %s219 = sand.u32 %s67, 1
        %s220 = smul.addr %s219, 128
        %s221 = scalar_lea.vmem [#allocation5], %s220
        // Predicated region
        $region37: #{tpu_custom_call.1} parent=31 // pred_check
          %p222 = pneg %p80
        $region38: #{tpu_custom_call.1} parent=31 // pred_check_branch
          %224 = sbr.rel (%p222) target = $region40
        $region39: #{tpu_custom_call.1} parent=31 // pred_region
          %225 = dma.done %s218, 2048
        $region40: #{tpu_custom_call.1} parent=31 // pred_fallthru
          _
        %s226 = sand.u32 %s21, 1
        %s227 = scalar_lea.sflag [#allocation6], %s226
        %s228 = sand.u32 %s93, 1
        %s229 = smul.addr %s228, 4
        %s230 = scalar_lea.vmem [#allocation7], %s229
        // Predicated region
        $region41: #{tpu_custom_call.1} parent=31 // pred_check
          %p231 = pneg %p106
        $region42: #{tpu_custom_call.1} parent=31 // pred_check_branch
          %233 = sbr.rel (%p231) target = $region44
        $region43: #{tpu_custom_call.1} parent=31 // pred_region
          %234 = dma.done %s227, 64
        $region44: #{tpu_custom_call.1} parent=31 // pred_fallthru
          _
        %p235 = pneg %p54
        %p236 = pneg %p51
        %s237 = sand.u32 %s21, 1
        %s238 = scalar_lea.sflag [#allocation6], %s237
        %s239 = sand.u32 %s67, 1
        %s240 = smul.addr %s239, 128
        %s241 = scalar_lea.vmem [#allocation5], %s240
        %p242 = pneg %p80
        %p243 = pneg %p77
        %s244 = sand.u32 %s21, 1
        %s245 = scalar_lea.sflag [#allocation6], %s244
        %s246 = sand.u32 %s93, 1
        %s247 = smul.addr %s246, 4
        %s248 = scalar_lea.vmem [#allocation7], %s247
        %p249 = pneg %p106
        %p250 = pneg %p103
        %p251 = pneg %p134
        %p252 = pneg %p131
        %s253 = sand.u32 %s121, 1
        %s254 = scalar_lea.sflag [#allocation4], %s253
        %s255 = sand.u32 %s121, 1
        %s256 = smul.addr %s255, 32
        %s257 = scalar_lea.vmem [#allocation8], %s256
        %s258 = smul.u32 4, %s26
        %s259 = smul.u32 4, %s26
        %s260 = smul.u32 4, %s26
        %v261 = vld [vmem:[#allocation2] sm:$0xff]
        %v262 = vld [vmem:[%s221] sm:$0xff]
        %v263 = vld [vmem:[%s221 + $0x8] sm:$0xff]
        %v264 = vld [vmem:[%s221 + $0x10] sm:$0xff]
        %v265 = vld [vmem:[%s221 + $0x18] sm:$0xff]
        %v266 = vld [vmem:[%s221 + $0x20] sm:$0xff]
        %v267 = vld [vmem:[%s221 + $0x28] sm:$0xff]
        %v268 = vld [vmem:[%s221 + $0x30] sm:$0xff]
        %v269 = vld [vmem:[%s221 + $0x38] sm:$0xff]
        %v270 = vld [vmem:[%s221 + $0x40] sm:$0xff]
        %v271 = vld [vmem:[%s221 + $0x48] sm:$0xff]
        %v272 = vld [vmem:[%s221 + $0x50] sm:$0xff]
        %v273 = vld [vmem:[%s221 + $0x58] sm:$0xff]
        %v274 = vld [vmem:[%s221 + $0x60] sm:$0xff]
        %v275 = vld [vmem:[%s221 + $0x68] sm:$0xff]
        %v276 = vld [vmem:[%s221 + $0x70] sm:$0xff]
        %v277 = vld [vmem:[%s221 + $0x78] sm:$0xff]
        %v278 = vld [vmem:[%s230] sm:$0xf]
        %v280 = vlaneseq
        %v281 = vshrl.u32 %v280, 7
        %v282 = vsub.s32 0, %v281
        %v283 = vrot.slane %v278, %v282
        %v284 = vlaneseq
        %v285 = vshrl.u32 %v284, 7
        %v286 = vsub.s32 1, %v285
        %v287 = vrot.slane %v278, %v286
        %v288 = vlaneseq
        %v289 = vshrl.u32 %v288, 7
        %v290 = vsub.s32 2, %v289
        %v291 = vrot.slane %v278, %v290
        %v292 = vlaneseq
        %v293 = vshrl.u32 %v292, 7
        %v294 = vsub.s32 3, %v293
        %v295 = vrot.slane %v278, %v294
        %vm300 = vcmask 261120
        %v302 = vsel %vm300, %v261, 0
        %304 = vmatprep.subr.mxu0 %v263
        %305 = vmatpush1.msra.mxu0 %v262
        %306 = vmatprep.subr.mxu0 %v267
        %307 = vmatpush1.msra.mxu0 %v266
        %308 = vmatprep.subr.mxu0 %v271
        %309 = vmatpush1.msra.mxu0 %v270
        %310 = vmatprep.subr.mxu0 %v275
        %311 = vmatpush1.msra.mxu0 %v274
        %312 = vmatprep.subr.mxu0 0.0
        %313 = vmatpush1.msra.mxu0 0.0
        %314 = vmatprep.subr.mxu0 0.0
        %315 = vmatpush1.msra.mxu0 0.0
        %316 = vmatprep.subr.mxu0 0.0
        %317 = vmatpush1.msra.mxu0 0.0
        %318 = vmatprep.subr.mxu0 0.0
        %319 = vmatpush1.msra.mxu0 0.0
        %320 = vmatprep.subr.mxu0 0.0
        %321 = vmatpush1.msra.mxu0 0.0
        %322 = vmatprep.subr.mxu0 0.0
        %323 = vmatpush1.msra.mxu0 0.0
        %324 = vmatprep.subr.mxu0 0.0
        %325 = vmatpush1.msra.mxu0 0.0
        %326 = vmatprep.subr.mxu0 0.0
        %327 = vmatpush1.msra.mxu0 0.0
        %328 = vmatprep.subr.mxu0 0.0
        %329 = vmatpush1.msra.mxu0 0.0
        %330 = vmatprep.subr.mxu0 0.0
        %331 = vmatpush1.msra.mxu0 0.0
        %332 = vmatprep.subr.mxu0 0.0
        %333 = vmatpush1.msra.mxu0 0.0
        %334 = vmatprep.subr.mxu0 0.0
        %335 = vmatpush1.msra.mxu0 0.0
        %336 = vmatprep.subr.mxu0 0.0
        %337 = vmatpush1.msra.mxu0 0.0
        %338 = vmatprep.subr.mxu0 0.0
        %339 = vmatpush1.msra.mxu0 0.0
        %340 = vmatprep.subr.mxu0 0.0
        %341 = vmatpush1.msra.mxu0 0.0
        %342 = vmatprep.subr.mxu0 0.0
        %343 = vmatpush1.msra.mxu0 0.0
        %344 = vmatprep.subr.mxu0 0.0
        %345 = vmatpush1.msra.mxu0 0.0
        %346 = vmatprep.subr.mxu0 0.0
        %347 = vmatpush1.msra.mxu0 0.0
        %348 = vmatprep.subr.mxu0 0.0
        %349 = vmatpush1.msra.mxu0 0.0
        %350 = vmatprep.subr.mxu0 0.0
        %351 = vmatpush1.msra.mxu0 0.0
        %352 = vmatprep.subr.mxu0 0.0
        %353 = vmatpush1.msra.mxu0 0.0
        %354 = vmatprep.subr.mxu0 0.0
        %355 = vmatpush1.msra.mxu0 0.0
        %356 = vmatprep.subr.mxu0 0.0
        %357 = vmatpush1.msra.mxu0 0.0
        %358 = vmatprep.subr.mxu0 0.0
        %359 = vmatpush1.msra.mxu0 0.0
        %360 = vmatprep.subr.mxu0 0.0
        %361 = vmatpush1.msra.mxu0 0.0
        %362 = vmatprep.subr.mxu0 0.0
        %363 = vmatpush1.msra.mxu0 0.0
        %364 = vmatprep.subr.mxu0 0.0
        %365 = vmatpush1.msra.mxu0 0.0
        %366 = vmatprep.subr.mxu0 0.0
        %367 = vmatpush1.msra.mxu0 0.0
        %368 = vmatprep.mubr.f32.mxu0 0.0
        %369 = vmatmul.mubr.f32.gmra.mrb[0].mxu0 %v302
        %v370 = vpop.f32.mrb[0].mxu0
        %v371 = vadd.f32 %v283, %v370
        %v372 = vpop.f32.mrb[0].mxu0
        %v373 = vadd.f32 %v287, %v372
        %374 = vdwg.mxu0
        %375 = vmatprep.subr.mxu0 %v265
        %376 = vmatpush1.msra.mxu0 %v264
        %377 = vmatprep.subr.mxu0 %v269
        %378 = vmatpush1.msra.mxu0 %v268
        %379 = vmatprep.subr.mxu0 %v273
        %380 = vmatpush1.msra.mxu0 %v272
        %381 = vmatprep.subr.mxu0 %v277
        %382 = vmatpush1.msra.mxu0 %v276
        %383 = vmatprep.subr.mxu0 0.0
        %384 = vmatpush1.msra.mxu0 0.0
        %385 = vmatprep.subr.mxu0 0.0
        %386 = vmatpush1.msra.mxu0 0.0
        %387 = vmatprep.subr.mxu0 0.0
        %388 = vmatpush1.msra.mxu0 0.0
        %389 = vmatprep.subr.mxu0 0.0
        %390 = vmatpush1.msra.mxu0 0.0
        %391 = vmatprep.subr.mxu0 0.0
        %392 = vmatpush1.msra.mxu0 0.0
        %393 = vmatprep.subr.mxu0 0.0
        %394 = vmatpush1.msra.mxu0 0.0
        %395 = vmatprep.subr.mxu0 0.0
        %396 = vmatpush1.msra.mxu0 0.0
        %397 = vmatprep.subr.mxu0 0.0
        %398 = vmatpush1.msra.mxu0 0.0
        %399 = vmatprep.subr.mxu0 0.0
        %400 = vmatpush1.msra.mxu0 0.0
        %401 = vmatprep.subr.mxu0 0.0
        %402 = vmatpush1.msra.mxu0 0.0
        %403 = vmatprep.subr.mxu0 0.0
        %404 = vmatpush1.msra.mxu0 0.0
        %405 = vmatprep.subr.mxu0 0.0
        %406 = vmatpush1.msra.mxu0 0.0
        %407 = vmatprep.subr.mxu0 0.0
        %408 = vmatpush1.msra.mxu0 0.0
        %409 = vmatprep.subr.mxu0 0.0
        %410 = vmatpush1.msra.mxu0 0.0
        %411 = vmatprep.subr.mxu0 0.0
        %412 = vmatpush1.msra.mxu0 0.0
        %413 = vmatprep.subr.mxu0 0.0
        %414 = vmatpush1.msra.mxu0 0.0
        %415 = vmatprep.subr.mxu0 0.0
        %416 = vmatpush1.msra.mxu0 0.0
        %417 = vmatprep.subr.mxu0 0.0
        %418 = vmatpush1.msra.mxu0 0.0
        %419 = vmatprep.subr.mxu0 0.0
        %420 = vmatpush1.msra.mxu0 0.0
        %421 = vmatprep.subr.mxu0 0.0
        %422 = vmatpush1.msra.mxu0 0.0
        %423 = vmatprep.subr.mxu0 0.0
        %424 = vmatpush1.msra.mxu0 0.0
        %425 = vmatprep.subr.mxu0 0.0
        %426 = vmatpush1.msra.mxu0 0.0
        %427 = vmatprep.subr.mxu0 0.0
        %428 = vmatpush1.msra.mxu0 0.0
        %429 = vmatprep.subr.mxu0 0.0
        %430 = vmatpush1.msra.mxu0 0.0
        %431 = vmatprep.subr.mxu0 0.0
        %432 = vmatpush1.msra.mxu0 0.0
        %433 = vmatprep.subr.mxu0 0.0
        %434 = vmatpush1.msra.mxu0 0.0
        %435 = vmatprep.subr.mxu0 0.0
        %436 = vmatpush1.msra.mxu0 0.0
        %437 = vmatprep.subr.mxu0 0.0
        %438 = vmatpush1.msra.mxu0 0.0
        %439 = vmatprep.mubr.f32.mxu0 0.0
        %440 = vmatmul.mubr.f32.gmra.mrb[0].mxu0 %v302
        %v441 = vpop.f32.mrb[0].mxu0
        %v442 = vadd.f32 %v291, %v441
        %v443 = vpop.f32.mrb[0].mxu0
        %v444 = vadd.f32 %v295, %v443
        %445 = vdwg.mxu0
        %446 = vst [vmem:[%s257] sm:$0xff] %v371
        %447 = vst [vmem:[%s257 + $0x8] sm:$0xff] %v373
        %448 = vst [vmem:[%s257 + $0x10] sm:$0xff] %v442
        %449 = vst [vmem:[%s257 + $0x18] sm:$0xff] %v444
        %s450 = sand.u32 %s121, 1
        %s451 = scalar_lea.sflag [#allocation4], %s450
        %s452 = sand.u32 %s121, 1
        %s453 = smul.addr %s452, 32
        %s454 = scalar_lea.vmem [#allocation8], %s453
        // Predicated region
        $region45: #{tpu_custom_call.1} parent=31 // pred_check
          %p455 = pneg %p131
        $region46: #{tpu_custom_call.1} parent=31 // pred_check_branch
          %457 = sbr.rel (%p455) target = $region48
        $region47: #{tpu_custom_call.1} parent=31 // pred_region
          %s458 = smul.u32 4, %s26
          %s460 = ssub.s32 512, 512
          %461 = vsyncadd %s451, %s460
          %s462 = smul.addr %s25, 8
          %s463 = sadd.s32 %s458, %s462
          %s464 = smul.addr %s463, 128
          %s465 = scalar_lea.hbm %s3, %s464
          %s467 = sshll.u32 %s454, 4
          %s468 = int_to_ptr.vmem [resolvable:$true] %s467
          %470 = dma.vmem_to_hbm [thread:$0]  %s468, 512, %s465, %s451
        $region48: #{tpu_custom_call.1} parent=31 // pred_fallthru
          _
      $region32: #{tpu_custom_call.1} parent=5 // pred_fallthru
        _
      %p471 = scmp.le.s32.totalorder 2, %s16
      // Predicated region
      $region49: #{tpu_custom_call.1} parent=5 // pred_check
        %p472 = pneg %p471
      $region50: #{tpu_custom_call.1} parent=5 // pred_check_branch
        %474 = sbr.rel (%p472) target = $region52
      $region51: #{tpu_custom_call.1} parent=5 // pred_region
        %s475 = ssub.s32 %s16, 2
        // Predicated region
        $region53: #{tpu_custom_call.1} parent=51 // pred_check
          %p476 = pneg %p137
        $region54: #{tpu_custom_call.1} parent=51 // pred_check_branch
          %478 = sbr.rel (%p476) target = $region56
        $region55: #{tpu_custom_call.1} parent=51 // pred_region
          %s479 = sand.u32 %s122, 1
          %s480 = scalar_lea.sflag [#allocation4], %s479
          %s481 = sand.u32 %s122, 1
          %s482 = smul.addr %s481, 32
          %s483 = scalar_lea.vmem [#allocation8], %s482
          %484 = dma.done %s480, 512
        $region56: #{tpu_custom_call.1} parent=51 // pred_fallthru
          _
      $region52: #{tpu_custom_call.1} parent=5 // pred_fallthru
        _
    $region6: #{tpu_custom_call.1} parent=1 // loop_footer
      %s20 = sadd.s32 1, %s16
    $region7: #{tpu_custom_call.1} parent=1 // loop_footer_branch
      %15 = sbr.rel target = $region3
    $region8: #{tpu_custom_call.1} parent=1 // loop_exit
      _
    %485 = vsyncpa [#allocation3], 1
    %s486 = scalar_lea.sflag [#allocation3], 1
    %487 = vsyncpa %s486, 1
    %488 = vsyncpa [#allocation6], 1
    %s489 = scalar_lea.sflag [#allocation6], 1
    %490 = vsyncpa %s489, 1
    %491 = vsyncpa [#allocation4], 1
    %s492 = scalar_lea.sflag [#allocation4], 1
    %493 = vsyncpa %s492, 1

</llo_original>
